<compile_context>
chip_gen: v7x
topology: tpu7x:2x2x1
jax: 0.10.0
libtpu: 0.0.40
codegen_flags: <defaults>
</compile_context>

<pallas_src>
import functools

import jax
import jax.numpy as jnp
from jax.experimental import pallas as pl
from jax.experimental.pallas import tpu as pltpu

_BLOCK_W = 1024   # lane-dense last dim (multiple of 128)
_BLOCK_R = 256    # rows per tile (multiple of 8) -> 1 MiB f32 / 0.5 MiB bf16 tile

# murmur3 fmix32 constants (as int32 two's-complement)
_M1 = -2048144789          # 0x85EBCA6B
_M2 = -1028477387          # 0xC2B2AE35
_GOLDEN = -1640531527      # 0x9E3779B9


def _fmix32(h):
    """murmur3 finalizer on int32; logical shifts emulated with shift+mask."""
    h = h ^ ((h >> 16) & 0xFFFF)
    h = h * _M1
    h = h ^ ((h >> 13) & 0x7FFFF)
    h = h * _M2
    h = h ^ ((h >> 16) & 0xFFFF)
    return h


def _dropin_kernel(seed_ref, x_ref, o_ref, *, p, v, max_mag, mag_prob_adj):
    block_rows, width = x_ref.shape
    x = x_ref[...]
    xf = x.astype(jnp.float32)

    # Global element index for this tile -> counter-based, tiling-independent PRNG.
    row_iota = jax.lax.broadcasted_iota(jnp.int32, (block_rows, width), 0)
    col_iota = jax.lax.broadcasted_iota(jnp.int32, (block_rows, width), 1)
    tile_off = pl.program_id(0) * (block_rows * width)
    gidx = tile_off + row_iota * width + col_iota

    seed = seed_ref[0]
    h = _fmix32(gidx + seed * _GOLDEN)

    # Split the 32 mixed bits into two independent 16-bit uniforms in [0, 1).
    u_drop = ((h >> 16) & 0xFFFF).astype(jnp.float32) * jnp.float32(1.0 / 65536.0)
    u_val = (h & 0xFFFF).astype(jnp.float32) * jnp.float32(1.0 / 65536.0)

    score = u_drop
    if mag_prob_adj != 0.0:                       # static (Python-level), like torch
        score = score + jnp.maximum(xf, 0.0) * jnp.float32(mag_prob_adj)
    mask = score < jnp.float32(p)
    if max_mag is not None:                       # static (Python-level), like torch
        mask = mask & (xf < jnp.float32(max_mag))

    vvals = u_val * jnp.float32(v)
    o_ref[...] = jnp.where(mask, vvals, xf).astype(o_ref.dtype)


def drop_in_rand(x, seed, *, p, v=1.0, max_mag=1.0, mag_prob_adj=0.0):
    """Flatten -> lane-dense (rows, 1024) slab -> Pallas elementwise kernel -> reshape back."""
    orig_shape = x.shape
    dtype = x.dtype
    n = x.size
    flat = x.reshape(-1)

    w = _BLOCK_W
    rows = -(-n // w)                      # ceil-div
    if rows >= _BLOCK_R:
        block_rows = _BLOCK_R
        rows = -(-rows // block_rows) * block_rows
    else:
        block_rows = rows                  # single full-array block (full dims -> no (8,128) constraint)
    padded = rows * w
    if padded != n:                        # static check: skip pad copy when aligned
        flat = jnp.pad(flat, (0, padded - n))
    x2 = flat.reshape(rows, w)
    grid = (rows // block_rows,)

    seed_arr = jnp.asarray([seed], dtype=jnp.int32)
    kernel = functools.partial(
        _dropin_kernel,
        p=float(p),
        v=float(v),
        max_mag=(None if max_mag is None else float(max_mag)),
        mag_prob_adj=float(mag_prob_adj),
    )

    out2 = pl.pallas_call(
        kernel,
        out_shape=jax.ShapeDtypeStruct((rows, w), dtype),
        grid_spec=pltpu.PrefetchScalarGridSpec(
            num_scalar_prefetch=1,         # seed lives in SMEM
            grid=grid,
            in_specs=[pl.BlockSpec((block_rows, w), lambda i, seed: (i, 0))],
            out_specs=pl.BlockSpec((block_rows, w), lambda i, seed: (i, 0)),
        ),
        compiler_params=pltpu.CompilerParams(dimension_semantics=("parallel",)),
    )(seed_arr, x2)

    out = out2
    if padded != n:                        # static check: skip tail-slice copy when aligned
        out = out.reshape(-1)[:n]
    return out.reshape(orig_shape)


# TODO(synk): only the forward pass is implemented; the torch backward (identity
# pass-through of grad_output) would be a separate trivial op, not a kernel.


if __name__ == "__main__":
    # Module config: DropInRand(p=0.3, v=1.0, max_mag=1.0, mag_prob_adj=0.0)
    p, v, max_mag, mag_prob_adj = 0.3, 1.0, 1.0, 0.0

    key = jax.random.PRNGKey(0)
    x = jax.random.normal(key, (2, 4, 16, 16), dtype=jnp.float32)  # NCHW-like input

    out = drop_in_rand(x, seed=42, p=p, v=v, max_mag=max_mag, mag_prob_adj=mag_prob_adj)
    out = jax.block_until_ready(out)

    assert out.shape == x.shape and out.dtype == x.dtype
    # Every element is either untouched (== x) or a fresh replacement in [0, v).
    ok_vals = (out == x) | ((out >= 0.0) & (out < v))
    # Replacements may only happen where x < max_mag.
    ok_gate = (out == x) | (x < max_mag)
    assert bool(jnp.all(ok_vals)) and bool(jnp.all(ok_gate))
    print("KERNEL_OK")
</pallas_src>

<mosaic_0001>
module attributes {stable_mosaic.version = 11 : i64} {
  func.func @_dropin_kernel(%arg0: i32, %arg1: memref<1xi32, #tpu.memory_space<smem>>, %arg2: memref<2x1024xf32, #tpu.memory_space<vmem>>, %arg3: memref<2x1024xf32, #tpu.memory_space<vmem>>) attributes {dimension_semantics = [#tpu.dimension_semantics<parallel>], iteration_bounds = array<i64: 1>, scalar_prefetch = 1 : i64, scratch_operands = 0 : i64, tpu.core_type = #tpu.core_type<tc>, window_params = [{transform_indices = @transform_0, window_bounds = array<i64: 2, 1024>}, {transform_indices = @transform_1, window_bounds = array<i64: 2, 1024>}]} {
    %c0 = arith.constant 0 : index
    %c0_0 = arith.constant 0 : index
    %0 = vector.load %arg2[%c0, %c0_0] : memref<2x1024xf32, #tpu.memory_space<vmem>>, vector<2x1024xf32>
    %1 = tpu.iota {dimensions = array<i32: 0>} : vector<2x1024xi32>
    %2 = tpu.iota {dimensions = array<i32: 1>} : vector<2x1024xi32>
    %c2048_i32 = arith.constant 2048 : i32
    %3 = arith.muli %arg0, %c2048_i32 : i32
    %c1024_i32 = arith.constant 1024 : i32
    %4 = vector.broadcast %c1024_i32 : i32 to vector<2x1024xi32>
    %5 = arith.muli %1, %4 : vector<2x1024xi32>
    %6 = vector.broadcast %3 : i32 to vector<2x1024xi32>
    %7 = arith.addi %6, %5 : vector<2x1024xi32>
    %8 = arith.addi %7, %2 : vector<2x1024xi32>
    %c0_1 = arith.constant 0 : index
    %9 = memref.load %arg1[%c0_1] : memref<1xi32, #tpu.memory_space<smem>>
    %c-1640531527_i32 = arith.constant -1640531527 : i32
    %10 = arith.muli %9, %c-1640531527_i32 : i32
    %11 = vector.broadcast %10 : i32 to vector<2x1024xi32>
    %12 = arith.addi %8, %11 : vector<2x1024xi32>
    %c16_i32 = arith.constant 16 : i32
    %13 = vector.broadcast %c16_i32 : i32 to vector<2x1024xi32>
    %14 = arith.shrsi %12, %13 : vector<2x1024xi32>
    %c65535_i32 = arith.constant 65535 : i32
    %15 = vector.broadcast %c65535_i32 : i32 to vector<2x1024xi32>
    %16 = arith.andi %14, %15 : vector<2x1024xi32>
    %17 = arith.xori %12, %16 : vector<2x1024xi32>
    %c-2048144789_i32 = arith.constant -2048144789 : i32
    %18 = vector.broadcast %c-2048144789_i32 : i32 to vector<2x1024xi32>
    %19 = arith.muli %17, %18 : vector<2x1024xi32>
    %c13_i32 = arith.constant 13 : i32
    %20 = vector.broadcast %c13_i32 : i32 to vector<2x1024xi32>
    %21 = arith.shrsi %19, %20 : vector<2x1024xi32>
    %c524287_i32 = arith.constant 524287 : i32
    %22 = vector.broadcast %c524287_i32 : i32 to vector<2x1024xi32>
    %23 = arith.andi %21, %22 : vector<2x1024xi32>
    %24 = arith.xori %19, %23 : vector<2x1024xi32>
    %c-1028477387_i32 = arith.constant -1028477387 : i32
    %25 = vector.broadcast %c-1028477387_i32 : i32 to vector<2x1024xi32>
    %26 = arith.muli %24, %25 : vector<2x1024xi32>
    %c16_i32_2 = arith.constant 16 : i32
    %27 = vector.broadcast %c16_i32_2 : i32 to vector<2x1024xi32>
    %28 = arith.shrsi %26, %27 : vector<2x1024xi32>
    %c65535_i32_3 = arith.constant 65535 : i32
    %29 = vector.broadcast %c65535_i32_3 : i32 to vector<2x1024xi32>
    %30 = arith.andi %28, %29 : vector<2x1024xi32>
    %31 = arith.xori %26, %30 : vector<2x1024xi32>
    %c16_i32_4 = arith.constant 16 : i32
    %32 = vector.broadcast %c16_i32_4 : i32 to vector<2x1024xi32>
    %33 = arith.shrsi %31, %32 : vector<2x1024xi32>
    %c65535_i32_5 = arith.constant 65535 : i32
    %34 = vector.broadcast %c65535_i32_5 : i32 to vector<2x1024xi32>
    %35 = arith.andi %33, %34 : vector<2x1024xi32>
    %36 = arith.sitofp %35 : vector<2x1024xi32> to vector<2x1024xf32>
    %cst = arith.constant 1.52587891E-5 : f32
    %37 = vector.broadcast %cst : f32 to vector<2x1024xf32>
    %38 = arith.mulf %36, %37 : vector<2x1024xf32>
    %c65535_i32_6 = arith.constant 65535 : i32
    %39 = vector.broadcast %c65535_i32_6 : i32 to vector<2x1024xi32>
    %40 = arith.andi %31, %39 : vector<2x1024xi32>
    %41 = arith.sitofp %40 : vector<2x1024xi32> to vector<2x1024xf32>
    %cst_7 = arith.constant 1.52587891E-5 : f32
    %42 = vector.broadcast %cst_7 : f32 to vector<2x1024xf32>
    %43 = arith.mulf %41, %42 : vector<2x1024xf32>
    %cst_8 = arith.constant 3.000000e-01 : f32
    %44 = vector.broadcast %cst_8 : f32 to vector<2x1024xf32>
    %45 = arith.cmpf olt, %38, %44 : vector<2x1024xf32>
    %cst_9 = arith.constant 1.000000e+00 : f32
    %46 = vector.broadcast %cst_9 : f32 to vector<2x1024xf32>
    %47 = arith.cmpf olt, %0, %46 : vector<2x1024xf32>
    %48 = arith.andi %45, %47 : vector<2x1024xi1>
    %cst_10 = arith.constant 1.000000e+00 : f32
    %49 = vector.broadcast %cst_10 : f32 to vector<2x1024xf32>
    %50 = arith.mulf %43, %49 : vector<2x1024xf32>
    %51 = arith.select %48, %50, %0 : vector<2x1024xi1>, vector<2x1024xf32>
    %c0_11 = arith.constant 0 : index
    %c0_12 = arith.constant 0 : index
    %52 = vector.load %arg3[%c0_11, %c0_12] : memref<2x1024xf32, #tpu.memory_space<vmem>>, vector<2x1024xf32>
    tpu.vector_store %arg3[%c0_11, %c0_12], %51 {strides = array<i32>} : memref<2x1024xf32, #tpu.memory_space<vmem>>, vector<2x1024xf32>,
    return
  }
  func.func @transform_0(%arg0: i32, %arg1: memref<1xi32, #tpu.memory_space<smem>>) -> (i32, i32) {
    %c0_i32 = arith.constant 0 : i32
    %c0_i32_0 = arith.constant 0 : i32
    return %arg0, %c0_i32 : i32, i32
  }
  func.func @transform_1(%arg0: i32, %arg1: memref<1xi32, #tpu.memory_space<smem>>) -> (i32, i32) {
    %c0_i32 = arith.constant 0 : i32
    %c0_i32_0 = arith.constant 0 : i32
    return %arg0, %c0_i32 : i32, i32
  }
}

</mosaic_0001>

<llo_original>
// kernel: tpu_custom_call.1
$region0: #{tpu_custom_call.1}
  #allocation0 [shape = 'u32[]', space=smem, size = 0x4, offset = 0x4, fixed_abs, tag = 'smem constant byte address 0x4 - core index']
  #allocation1 [shape = 'u32[144,128]{1,0:T(1,128)}', space=vmem, size = 0x12000, scoped, tag = 'internal scratch']
  #allocation2 [shape = 's32[1]{0}', space=sflag, size = 0x4, scoped, tag = 'scoped memory for tpu_custom_call.1']
  #allocation3 [shape = 's32[1]{0:T(128)S(6)}', space=smem, size = 0x200, scoped, tag = 'prefetched SMEM operand 0']
  %s0 = inlined_call_operand.<no memory space> [shape: s32[1], index: 0, kind: input, shape index: {}]
  %s1 = inlined_call_operand.hbm [shape: f32[2,1024], index: 1, kind: input, shape index: {}]
  %s2 = inlined_call_operand.hbm [shape: f32[2,1024], index: 2, kind: output, shape index: {}]
  %s3 = sld [smem:[#allocation0]]
  $region18: #{tpu_custom_call.1} parent=0
    _
  %s5 = ssub.s32 1, %s3
  %s6 = scalar_select 0, %s5, %s3
  %7 = sst [smem:[#allocation3]] %s0
  $region1: #{tpu_custom_call.1} parent=0
    #allocation4 [shape = 'u8[8192]{0}', space=vmem, size = 0x2000, scoped, tag = 'input window, operand 1, single buffered']
    #allocation5 [shape = 's32[1]{0}', space=sflag, size = 0x4, scoped, tag = 'scoped memory for tpu_custom_call.1']
    #allocation6 [shape = 's32[1]{0}', space=sflag, size = 0x4, scoped, tag = 'scoped memory for tpu_custom_call.1']
    #allocation7 [shape = 'u8[8192]{0}', space=vmem, size = 0x2000, scoped, tag = 'output window, operand 0, single buffered']
    %8 = vsyncpa [#allocation5], 0
    %9 = vsyncpa [#allocation6], 0
    // Predicated region
    $region2: #{tpu_custom_call.1} parent=1 // pred_check
      _
    $region3: #{tpu_custom_call.1} parent=1 // pred_check_branch
      %11 = sbr.rel (0) target = $region5
    $region4: #{tpu_custom_call.1} parent=1 // pred_region
      %s13 = ssub.s32 256, 256
      %14 = vsyncadd [#allocation5], %s13
      %s16 = sshll.u32 [#allocation4], 4
      %s17 = int_to_ptr.vmem [resolvable:$true] %s16
      %19 = dma.hbm_to_vmem [thread:$0]  %s1, 256, %s17, [#allocation5]
    $region5: #{tpu_custom_call.1} parent=1 // pred_fallthru
      _
    // Predicated region
    $region6: #{tpu_custom_call.1} parent=1 // pred_check
      _
    $region7: #{tpu_custom_call.1} parent=1 // pred_check_branch
      %21 = sbr.rel (0) target = $region9
    $region8: #{tpu_custom_call.1} parent=1 // pred_region
      %22 = dma.done [#allocation5], 256
    $region9: #{tpu_custom_call.1} parent=1 // pred_fallthru
      _
    %v23 = vld [vmem:[#allocation4] sm:$0xff]
    %v24 = vld [vmem:[#allocation4 + $0x8] sm:$0xff]
    %v25 = vlaneseq
    %v26 = vshrl.u32 %v25, 7
    %v27 = vlaneseq
    %v28 = vand.u32 %v27, 127
    %v29 = vadd.s32 %v28, 128
    %v30 = vadd.s32 %v28, 256
    %v31 = vadd.s32 %v28, 384
    %v32 = vadd.s32 %v28, 512
    %v33 = vadd.s32 %v28, 640
    %v34 = vadd.s32 %v28, 768
    %v35 = vadd.s32 %v28, 896
    %s36 = smul.u32 0, 2048
    %v37 = vmul.u32 %v26, 1024
    %v38 = vstv %s36
    %v39 = vadd.s32 %v38, %v37
    %v40 = vadd.s32 %v39, %v28
    %v41 = vadd.s32 %v39, %v29
    %v42 = vadd.s32 %v39, %v30
    %v43 = vadd.s32 %v39, %v31
    %v44 = vadd.s32 %v39, %v32
    %v45 = vadd.s32 %v39, %v33
    %v46 = vadd.s32 %v39, %v34
    %v47 = vadd.s32 %v39, %v35
    %s48 = sld [smem:[#allocation3]]
    %s49 = smul.u32 %s48, 2654435769
    %v50 = vstv %s49
    %v51 = vadd.s32 %v40, %v50
    %v52 = vadd.s32 %v41, %v50
    %v53 = vadd.s32 %v42, %v50
    %v54 = vadd.s32 %v43, %v50
    %v55 = vadd.s32 %v44, %v50
    %v56 = vadd.s32 %v45, %v50
    %v57 = vadd.s32 %v46, %v50
    %v58 = vadd.s32 %v47, %v50
    %v59 = vshra.s32 %v51, 16
    %v60 = vshra.s32 %v52, 16
    %v61 = vshra.s32 %v53, 16
    %v62 = vshra.s32 %v54, 16
    %v63 = vshra.s32 %v55, 16
    %v64 = vshra.s32 %v56, 16
    %v65 = vshra.s32 %v57, 16
    %v66 = vshra.s32 %v58, 16
    %v67 = vand.u32 %v59, 65535
    %v68 = vand.u32 %v60, 65535
    %v69 = vand.u32 %v61, 65535
    %v70 = vand.u32 %v62, 65535
    %v71 = vand.u32 %v63, 65535
    %v72 = vand.u32 %v64, 65535
    %v73 = vand.u32 %v65, 65535
    %v74 = vand.u32 %v66, 65535
    %v75 = vxor.u32 %v51, %v67
    %v76 = vxor.u32 %v52, %v68
    %v77 = vxor.u32 %v53, %v69
    %v78 = vxor.u32 %v54, %v70
    %v79 = vxor.u32 %v55, %v71
    %v80 = vxor.u32 %v56, %v72
    %v81 = vxor.u32 %v57, %v73
    %v82 = vxor.u32 %v58, %v74
    %v83 = vmul.u32 %v75, 2246822507
    %v84 = vmul.u32 %v76, 2246822507
    %v85 = vmul.u32 %v77, 2246822507
    %v86 = vmul.u32 %v78, 2246822507
    %v87 = vmul.u32 %v79, 2246822507
    %v88 = vmul.u32 %v80, 2246822507
    %v89 = vmul.u32 %v81, 2246822507
    %v90 = vmul.u32 %v82, 2246822507
    %v91 = vshra.s32 %v83, 13
    %v92 = vshra.s32 %v84, 13
    %v93 = vshra.s32 %v85, 13
    %v94 = vshra.s32 %v86, 13
    %v95 = vshra.s32 %v87, 13
    %v96 = vshra.s32 %v88, 13
    %v97 = vshra.s32 %v89, 13
    %v98 = vshra.s32 %v90, 13
    %v99 = vand.u32 %v91, 524287
    %v100 = vand.u32 %v92, 524287
    %v101 = vand.u32 %v93, 524287
    %v102 = vand.u32 %v94, 524287
    %v103 = vand.u32 %v95, 524287
    %v104 = vand.u32 %v96, 524287
    %v105 = vand.u32 %v97, 524287
    %v106 = vand.u32 %v98, 524287
    %v107 = vxor.u32 %v83, %v99
    %v108 = vxor.u32 %v84, %v100
    %v109 = vxor.u32 %v85, %v101
    %v110 = vxor.u32 %v86, %v102
    %v111 = vxor.u32 %v87, %v103
    %v112 = vxor.u32 %v88, %v104
    %v113 = vxor.u32 %v89, %v105
    %v114 = vxor.u32 %v90, %v106
    %v115 = vmul.u32 %v107, 3266489909
    %v116 = vmul.u32 %v108, 3266489909
    %v117 = vmul.u32 %v109, 3266489909
    %v118 = vmul.u32 %v110, 3266489909
    %v119 = vmul.u32 %v111, 3266489909
    %v120 = vmul.u32 %v112, 3266489909
    %v121 = vmul.u32 %v113, 3266489909
    %v122 = vmul.u32 %v114, 3266489909
    %v123 = vshra.s32 %v115, 16
    %v124 = vshra.s32 %v116, 16
    %v125 = vshra.s32 %v117, 16
    %v126 = vshra.s32 %v118, 16
    %v127 = vshra.s32 %v119, 16
    %v128 = vshra.s32 %v120, 16
    %v129 = vshra.s32 %v121, 16
    %v130 = vshra.s32 %v122, 16
    %v131 = vand.u32 %v123, 65535
    %v132 = vand.u32 %v124, 65535
    %v133 = vand.u32 %v125, 65535
    %v134 = vand.u32 %v126, 65535
    %v135 = vand.u32 %v127, 65535
    %v136 = vand.u32 %v128, 65535
    %v137 = vand.u32 %v129, 65535
    %v138 = vand.u32 %v130, 65535
    %v139 = vxor.u32 %v115, %v131
    %v140 = vxor.u32 %v116, %v132
    %v141 = vxor.u32 %v117, %v133
    %v142 = vxor.u32 %v118, %v134
    %v143 = vxor.u32 %v119, %v135
    %v144 = vxor.u32 %v120, %v136
    %v145 = vxor.u32 %v121, %v137
    %v146 = vxor.u32 %v122, %v138
    %v147 = vshra.s32 %v139, 16
    %v148 = vshra.s32 %v140, 16
    %v149 = vshra.s32 %v141, 16
    %v150 = vshra.s32 %v142, 16
    %v151 = vshra.s32 %v143, 16
    %v152 = vshra.s32 %v144, 16
    %v153 = vshra.s32 %v145, 16
    %v154 = vshra.s32 %v146, 16
    %v155 = vand.u32 %v147, 65535
    %v156 = vand.u32 %v148, 65535
    %v157 = vand.u32 %v149, 65535
    %v158 = vand.u32 %v150, 65535
    %v159 = vand.u32 %v151, 65535
    %v160 = vand.u32 %v152, 65535
    %v161 = vand.u32 %v153, 65535
    %v162 = vand.u32 %v154, 65535
    %v163 = vcvt.s32.f32 %v155
    %v164 = vcvt.s32.f32 %v156
    %v165 = vcvt.s32.f32 %v157
    %v166 = vcvt.s32.f32 %v158
    %v167 = vcvt.s32.f32 %v159
    %v168 = vcvt.s32.f32 %v160
    %v169 = vcvt.s32.f32 %v161
    %v170 = vcvt.s32.f32 %v162
    %v171 = vmul.f32 %v163, 1.5258789e-05
    %v172 = vmul.f32 %v164, 1.5258789e-05
    %v173 = vmul.f32 %v165, 1.5258789e-05
    %v174 = vmul.f32 %v166, 1.5258789e-05
    %v175 = vmul.f32 %v167, 1.5258789e-05
    %v176 = vmul.f32 %v168, 1.5258789e-05
    %v177 = vmul.f32 %v169, 1.5258789e-05
    %v178 = vmul.f32 %v170, 1.5258789e-05
    %v179 = vand.u32 %v139, 65535
    %v180 = vand.u32 %v140, 65535
    %v181 = vand.u32 %v141, 65535
    %v182 = vand.u32 %v142, 65535
    %v183 = vand.u32 %v143, 65535
    %v184 = vand.u32 %v144, 65535
    %v185 = vand.u32 %v145, 65535
    %v186 = vand.u32 %v146, 65535
    %v187 = vcvt.s32.f32 %v179
    %v188 = vcvt.s32.f32 %v180
    %v189 = vcvt.s32.f32 %v181
    %v190 = vcvt.s32.f32 %v182
    %v191 = vcvt.s32.f32 %v183
    %v192 = vcvt.s32.f32 %v184
    %v193 = vcvt.s32.f32 %v185
    %v194 = vcvt.s32.f32 %v186
    %v195 = vmul.f32 %v187, 1.5258789e-05
    %v196 = vmul.f32 %v188, 1.5258789e-05
    %v197 = vmul.f32 %v189, 1.5258789e-05
    %v198 = vmul.f32 %v190, 1.5258789e-05
    %v199 = vmul.f32 %v191, 1.5258789e-05
    %v200 = vmul.f32 %v192, 1.5258789e-05
    %v201 = vmul.f32 %v193, 1.5258789e-05
    %v202 = vmul.f32 %v194, 1.5258789e-05
    %vm203 = vcmp.lt.f32.partialorder %v171, 0.3
    %vm204 = vcmp.lt.f32.partialorder %v172, 0.3
    %vm205 = vcmp.lt.f32.partialorder %v173, 0.3
    %vm206 = vcmp.lt.f32.partialorder %v174, 0.3
    %vm207 = vcmp.lt.f32.partialorder %v175, 0.3
    %vm208 = vcmp.lt.f32.partialorder %v176, 0.3
    %vm209 = vcmp.lt.f32.partialorder %v177, 0.3
    %vm210 = vcmp.lt.f32.partialorder %v178, 0.3
    %vm211 = vcmp.lt.f32.partialorder %v23, 1.0
    %vm212 = vcmp.lt.f32.partialorder %v24, 1.0
    %v213 = vsel %vm211, 1, 0
    %v214 = vsel %vm212, 1, 0
    %v215 = vcombine.high %v213, %v213
    %v217 = vunpack.c.l.s4 1983009808
    %v218 = vunpack.c.0.s8 %v217
    %v219 = vlaneseq
    %v220 = vshrl.u32 %v219, 7
    %v221 = vsub.s32 %v218, %v220
    %v222 = vrot.slane %v213, %v221
    %v224 = vunpack.c.l.s4 1983009808
    %v225 = vunpack.c.0.s8 %v224
    %v226 = vlaneseq
    %v227 = vshrl.u32 %v226, 7
    %v228 = vsub.s32 %v225, %v227
    %v229 = vrot.slane %v215, %v228
    %v230 = vcombine.high %v222, %v222
    %v231 = vcombine.high %v229, %v229
    %v232 = vcombine.high %v214, %v214
    %v234 = vunpack.c.l.s4 1983009808
    %v235 = vunpack.c.0.s8 %v234
    %v236 = vlaneseq
    %v237 = vshrl.u32 %v236, 7
    %v238 = vsub.s32 %v235, %v237
    %v239 = vrot.slane %v214, %v238
    %v241 = vunpack.c.l.s4 1983009808
    %v242 = vunpack.c.0.s8 %v241
    %v243 = vlaneseq
    %v244 = vshrl.u32 %v243, 7
    %v245 = vsub.s32 %v242, %v244
    %v246 = vrot.slane %v232, %v245
    %v247 = vcombine.high %v239, %v239
    %v248 = vcombine.high %v246, %v246
    %vm249 = vcmp.ne.s32.totalorder %v222, 0
    %vm250 = vcmp.ne.s32.totalorder %v230, 0
    %vm251 = vcmp.ne.s32.totalorder %v229, 0
    %vm252 = vcmp.ne.s32.totalorder %v231, 0
    %vm253 = vcmp.ne.s32.totalorder %v239, 0
    %vm254 = vcmp.ne.s32.totalorder %v247, 0
    %vm255 = vcmp.ne.s32.totalorder %v246, 0
    %vm256 = vcmp.ne.s32.totalorder %v248, 0
    %vm257 = vmand %vm203, %vm249
    %vm258 = vmand %vm204, %vm250
    %vm259 = vmand %vm205, %vm251
    %vm260 = vmand %vm206, %vm252
    %vm261 = vmand %vm207, %vm253
    %vm262 = vmand %vm208, %vm254
    %vm263 = vmand %vm209, %vm255
    %vm264 = vmand %vm210, %vm256
    %v267 = vcombine.high %v23, %v23
    %v269 = vunpack.c.l.s4 1983009808
    %v270 = vunpack.c.0.s8 %v269
    %v271 = vlaneseq
    %v272 = vshrl.u32 %v271, 7
    %v273 = vsub.s32 %v270, %v272
    %v274 = vrot.slane %v23, %v273
    %v276 = vunpack.c.l.s4 1983009808
    %v277 = vunpack.c.0.s8 %v276
    %v278 = vlaneseq
    %v279 = vshrl.u32 %v278, 7
    %v280 = vsub.s32 %v277, %v279
    %v281 = vrot.slane %v267, %v280
    %v282 = vcombine.high %v274, %v274
    %v283 = vcombine.high %v281, %v281
    %v284 = vcombine.high %v24, %v24
    %v286 = vunpack.c.l.s4 1983009808
    %v287 = vunpack.c.0.s8 %v286
    %v288 = vlaneseq
    %v289 = vshrl.u32 %v288, 7
    %v290 = vsub.s32 %v287, %v289
    %v291 = vrot.slane %v24, %v290
    %v293 = vunpack.c.l.s4 1983009808
    %v294 = vunpack.c.0.s8 %v293
    %v295 = vlaneseq
    %v296 = vshrl.u32 %v295, 7
    %v297 = vsub.s32 %v294, %v296
    %v298 = vrot.slane %v284, %v297
    %v299 = vcombine.high %v291, %v291
    %v300 = vcombine.high %v298, %v298
    %v309 = vsel %vm257, %v195, %v274
    %v310 = vsel %vm258, %v196, %v282
    %v311 = vsel %vm259, %v197, %v281
    %v312 = vsel %vm260, %v198, %v283
    %v313 = vsel %vm261, %v199, %v291
    %v314 = vsel %vm262, %v200, %v299
    %v315 = vsel %vm263, %v201, %v298
    %v316 = vsel %vm264, %v202, %v300
    %v325 = vcombine.low %v309, %v310
    %v326 = vcombine.low %v311, %v312
    %v328 = vunpack.c.l.s4 1983009808
    %v329 = vunpack.c.0.s8 %v328
    %v330 = vlaneseq
    %v331 = vshrl.u32 %v330, 7
    %v332 = vsub.s32 %v329, %v331
    %v333 = vrot.slane %v325, %v332
    %v335 = vunpack.c.l.s4 1983009808
    %v336 = vunpack.c.0.s8 %v335
    %v337 = vlaneseq
    %v338 = vshrl.u32 %v337, 7
    %v339 = vsub.s32 %v336, %v338
    %v340 = vrot.slane %v326, %v339
    %v341 = vcombine.low %v333, %v340
    %v342 = vcombine.low %v313, %v314
    %v343 = vcombine.low %v315, %v316
    %v345 = vunpack.c.l.s4 1983009808
    %v346 = vunpack.c.0.s8 %v345
    %v347 = vlaneseq
    %v348 = vshrl.u32 %v347, 7
    %v349 = vsub.s32 %v346, %v348
    %v350 = vrot.slane %v342, %v349
    %v352 = vunpack.c.l.s4 1983009808
    %v353 = vunpack.c.0.s8 %v352
    %v354 = vlaneseq
    %v355 = vshrl.u32 %v354, 7
    %v356 = vsub.s32 %v353, %v355
    %v357 = vrot.slane %v343, %v356
    %v358 = vcombine.low %v350, %v357
    %361 = vst [vmem:[#allocation7] sm:$0xff] %v341
    %362 = vst [vmem:[#allocation7 + $0x8] sm:$0xff] %v358
    // Predicated region
    $region10: #{tpu_custom_call.1} parent=1 // pred_check
      _
    $region11: #{tpu_custom_call.1} parent=1 // pred_check_branch
      %364 = sbr.rel (0) target = $region13
    $region12: #{tpu_custom_call.1} parent=1 // pred_region
      %s366 = ssub.s32 256, 256
      %367 = vsyncadd [#allocation6], %s366
      %s369 = sshll.u32 [#allocation7], 4
      %s370 = int_to_ptr.vmem [resolvable:$true] %s369
      %372 = dma.vmem_to_hbm [thread:$0]  %s370, 256, %s2, [#allocation6]
    $region13: #{tpu_custom_call.1} parent=1 // pred_fallthru
      _
    // Predicated region
    $region14: #{tpu_custom_call.1} parent=1 // pred_check
      _
    $region15: #{tpu_custom_call.1} parent=1 // pred_check_branch
      %374 = sbr.rel (0) target = $region17
    $region16: #{tpu_custom_call.1} parent=1 // pred_region
      %375 = dma.done [#allocation6], 256
    $region17: #{tpu_custom_call.1} parent=1 // pred_fallthru
      _
    %376 = vsyncpa [#allocation5], 1
    %377 = vsyncpa [#allocation6], 1

</llo_original>
